<compile_context>
chip_gen: v6e
topology: v6e:2x2x1
jax: 0.10.0
libtpu: 0.0.40
codegen_flags: <defaults>
</compile_context>

<pallas_src>
import jax
import jax.numpy as jnp
from jax.experimental import pallas as pl
from jax.experimental.pallas import tpu as pltpu

INPUT_DIM = 100
H1 = 512
H2 = 256
OUT_DIM = 1
NEG_SLOPE = 0.2
B_PACK = H1 + H2 + OUT_DIM  # 769 packed bias entries


def _round_up(x, m):
    return (x + m - 1) // m * m


def _leaky_relu(h):
    # max(h, 0.2*h) == LeakyReLU(0.2) for all h; single VPU select.
    return jnp.maximum(h, NEG_SLOPE * h)


def discriminator_kernel(x_ref, w1_ref, w2_ref, w3r_ref, b_ref, o_ref):
    # Packed biases: [b1 (512) | b2 (256) | b3 (1)]  -- lane-aligned slices.
    b1 = b_ref[:, :H1]
    b2 = b_ref[:, H1:H1 + H2]
    b3 = b_ref[:, H1 + H2:]

    # x tile in bf16 for the MXU; accumulation stays f32.
    x = x_ref[...].astype(jnp.bfloat16)

    # Layer 1: Linear(100 -> 512) + LeakyReLU(0.2)
    h = jnp.dot(x, w1_ref[...], preferred_element_type=jnp.float32)
    h = _leaky_relu(h + b1)

    # Layer 2: Linear(512 -> 256) + LeakyReLU(0.2)
    h = jnp.dot(h.astype(jnp.bfloat16), w2_ref[...],
                preferred_element_type=jnp.float32)
    h = _leaky_relu(h + b2)

    # Layer 3: Linear(256 -> 1) + Sigmoid, emitted lane-dense as a (1, TB) row:
    #   logit[0, t] = sum_d w3[0, d] * h[t, d] + b3
    logit = jax.lax.dot_general(
        w3r_ref[...], h, (((1,), (1,)), ((), ())),
        preferred_element_type=jnp.float32) + b3
    o_ref[...] = jax.nn.sigmoid(logit).reshape(o_ref.shape)


def _choose_tile(B):
    """Batch-tile size.

    * B < 32   : one grid step (splitting tiny batches buys nothing).
    * B >= 32  : at least 2 grid steps so v7x's 2 TensorCores both get work,
                 capped at 1024 rows/tile to amortize per-step overhead while
                 staying far inside default scoped VMEM on v5e/v6e/v7x.
    """
    if B < 32:
        return B
    return min(1024, _round_up(-(-B // 2), 8))


@jax.jit
def discriminator_forward(x, packed_params):
    """x: (B, INPUT_DIM) float32.  Returns (B, 1) float32 in (0, 1)."""
    w1, w2, w3_row, bias = packed_params
    B = x.shape[0]

    TB = _choose_tile(B)
    nb = pl.cdiv(B, TB)

    out = pl.pallas_call(
        discriminator_kernel,
        out_shape=jax.ShapeDtypeStruct((nb, 1, TB), jnp.float32),
        grid=(nb,),
        in_specs=[
            pl.BlockSpec((TB, INPUT_DIM), lambda i: (i, 0)),   # streamed x tile (ragged last block OK)
            pl.BlockSpec((INPUT_DIM, H1), lambda i: (0, 0)),   # resident W1 (bf16)
            pl.BlockSpec((H1, H2), lambda i: (0, 0)),          # resident W2 (bf16)
            pl.BlockSpec((1, H2), lambda i: (0, 0)),           # resident W3 row (f32)
            pl.BlockSpec((1, B_PACK), lambda i: (0, 0)),       # packed biases
        ],
        out_specs=pl.BlockSpec((1, 1, TB), lambda i: (i, 0, 0)),  # lane-dense row per tile
        compiler_params=pltpu.CompilerParams(
            dimension_semantics=("parallel",)),
    )(x, w1, w2, w3_row, bias)

    # Tiny output relayout: (nb, 1, TB) -> (B, 1), dropping any ragged pad rows.
    return out.reshape(nb * TB)[:B].reshape(B, OUT_DIM)


def init_params(key):
    """Deterministic synthetic parameters (PyTorch-Linear-style uniform init).

    Weights are stored as (in_features, out_features) so the kernel computes
    y = x @ W + b (transpose of PyTorch's (out, in) storage).
    """
    ks = jax.random.split(key, 6)

    def linear(kw, kb, fan_in, fan_out):
        bound = 1.0 / float(jnp.sqrt(jnp.float32(fan_in)))
        w = jax.random.uniform(kw, (fan_in, fan_out), jnp.float32, -bound, bound)
        b = jax.random.uniform(kb, (fan_out,), jnp.float32, -bound, bound)
        return w, b

    w1, b1 = linear(ks[0], ks[1], INPUT_DIM, H1)
    w2, b2 = linear(ks[2], ks[3], H1, H2)
    w3, b3 = linear(ks[4], ks[5], H2, OUT_DIM)
    return (w1, b1, w2, b2, w3, b3)


def pack_params(params):
    """One-time packing for the kernel (hoisted out of the per-call path)."""
    w1, b1, w2, b2, w3, b3 = params
    w1_bf = w1.astype(jnp.bfloat16)                             # MXU-native operands
    w2_bf = w2.astype(jnp.bfloat16)
    w3_row = w3.reshape(1, H2)                                  # (256,1) -> (1,256), kept f32
    bias = jnp.concatenate([b1, b2, b3]).reshape(1, B_PACK)     # (1, 769)
    return (w1_bf, w2_bf, w3_row, bias)


def reference_forward(x, params):
    """Pure-JAX f32 reference mirroring the PyTorch forward."""
    w1, b1, w2, b2, w3, b3 = params
    h = x @ w1 + b1
    h = jnp.where(h >= 0, h, NEG_SLOPE * h)
    h = h @ w2 + b2
    h = jnp.where(h >= 0, h, NEG_SLOPE * h)
    return jax.nn.sigmoid(h @ w3 + b3)


if __name__ == "__main__":
    key = jax.random.PRNGKey(0)
    k_x, k_p = jax.random.split(key)

    batch = 8
    x = jax.random.normal(k_x, (batch, INPUT_DIM), jnp.float32)
    params = init_params(k_p)
    packed = pack_params(params)

    out = discriminator_forward(x, packed)
    out = jax.block_until_ready(out)

    ref = reference_forward(x, params)
    assert out.shape == (batch, OUT_DIM), out.shape
    # bf16 matmul operands (f32 accumulation) vs. the pure-f32 reference.
    assert jnp.allclose(out, ref, atol=2e-2, rtol=2e-2), (
        float(jnp.max(jnp.abs(out - ref))))

    print("KERNEL_OK")
</pallas_src>

<mosaic_0001>
module attributes {stable_mosaic.version = 11 : i64} {
  func.func @discriminator_kernel(%arg0: i32, %arg1: memref<8x100xf32, #tpu.memory_space<vmem>>, %arg2: memref<100x512xbf16, #tpu.memory_space<vmem>>, %arg3: memref<512x256xbf16, #tpu.memory_space<vmem>>, %arg4: memref<1x256xf32, #tpu.memory_space<vmem>>, %arg5: memref<1x769xf32, #tpu.memory_space<vmem>>, %arg6: memref<1x1x8xf32, #tpu.memory_space<vmem>>) attributes {dimension_semantics = [#tpu.dimension_semantics<parallel>], iteration_bounds = array<i64: 1>, scalar_prefetch = 0 : i64, scratch_operands = 0 : i64, tpu.core_type = #tpu.core_type<tc>, window_params = [{transform_indices = @transform_0, window_bounds = array<i64: 8, 100>}, {pipeline_mode = #tpu.pipeline_mode<synchronous>, transform_indices = @transform_1, window_bounds = array<i64: 100, 512>}, {pipeline_mode = #tpu.pipeline_mode<synchronous>, transform_indices = @transform_2, window_bounds = array<i64: 512, 256>}, {pipeline_mode = #tpu.pipeline_mode<synchronous>, transform_indices = @transform_3, window_bounds = array<i64: 1, 256>}, {pipeline_mode = #tpu.pipeline_mode<synchronous>, transform_indices = @transform_4, window_bounds = array<i64: 1, 769>}, {transform_indices = @transform_5, window_bounds = array<i64: 1, 1, 8>}]} {
    %c0 = arith.constant 0 : index
    %c0_0 = arith.constant 0 : index
    %0 = vector.load %arg5[%c0, %c0_0] : memref<1x769xf32, #tpu.memory_space<vmem>>, vector<1x512xf32>
    %c0_1 = arith.constant 0 : index
    %c512 = arith.constant 512 : index
    %1 = vector.load %arg5[%c0_1, %c512] : memref<1x769xf32, #tpu.memory_space<vmem>>, vector<1x256xf32>
    %c0_2 = arith.constant 0 : index
    %c768 = arith.constant 768 : index
    %2 = vector.load %arg5[%c0_2, %c768] : memref<1x769xf32, #tpu.memory_space<vmem>>, vector<1x1xf32>
    %c0_3 = arith.constant 0 : index
    %c0_4 = arith.constant 0 : index
    %3 = vector.load %arg1[%c0_3, %c0_4] : memref<8x100xf32, #tpu.memory_space<vmem>>, vector<8x100xf32>
    %4 = arith.truncf %3 : vector<8x100xf32> to vector<8x100xbf16>
    %c0_5 = arith.constant 0 : index
    %c0_6 = arith.constant 0 : index
    %5 = vector.load %arg2[%c0_5, %c0_6] : memref<100x512xbf16, #tpu.memory_space<vmem>>, vector<100x512xbf16>
    %cst = arith.constant dense<0.000000e+00> : vector<8x512xf32>
    %6 = tpu.matmul %4, %5, %cst {dimension_numbers = #tpu.dot_dimension_numbers<[1], [0], [0], [1], [0, 0, 1, 1], [], []>} : vector<8x100xbf16>, vector<100x512xbf16>, vector<8x512xf32> -> vector<8x512xf32>
    %7 = vector.broadcast %0 : vector<1x512xf32> to vector<8x512xf32>
    %8 = arith.addf %6, %7 : vector<8x512xf32>
    %cst_7 = arith.constant 2.000000e-01 : f32
    %9 = vector.broadcast %cst_7 : f32 to vector<8x512xf32>
    %10 = arith.mulf %9, %8 : vector<8x512xf32>
    %11 = arith.maximumf %8, %10 : vector<8x512xf32>
    %12 = arith.truncf %11 : vector<8x512xf32> to vector<8x512xbf16>
    %c0_8 = arith.constant 0 : index
    %c0_9 = arith.constant 0 : index
    %13 = vector.load %arg3[%c0_8, %c0_9] : memref<512x256xbf16, #tpu.memory_space<vmem>>, vector<512x256xbf16>
    %cst_10 = arith.constant dense<0.000000e+00> : vector<8x256xf32>
    %14 = tpu.matmul %12, %13, %cst_10 {dimension_numbers = #tpu.dot_dimension_numbers<[1], [0], [0], [1], [0, 0, 1, 1], [], []>} : vector<8x512xbf16>, vector<512x256xbf16>, vector<8x256xf32> -> vector<8x256xf32>
    %15 = vector.broadcast %1 : vector<1x256xf32> to vector<8x256xf32>
    %16 = arith.addf %14, %15 : vector<8x256xf32>
    %cst_11 = arith.constant 2.000000e-01 : f32
    %17 = vector.broadcast %cst_11 : f32 to vector<8x256xf32>
    %18 = arith.mulf %17, %16 : vector<8x256xf32>
    %19 = arith.maximumf %16, %18 : vector<8x256xf32>
    %c0_12 = arith.constant 0 : index
    %c0_13 = arith.constant 0 : index
    %20 = vector.load %arg4[%c0_12, %c0_13] : memref<1x256xf32, #tpu.memory_space<vmem>>, vector<1x256xf32>
    %cst_14 = arith.constant dense<0.000000e+00> : vector<1x8xf32>
    %21 = tpu.matmul %20, %19, %cst_14 {dimension_numbers = #tpu.dot_dimension_numbers<[1], [1], [0], [0], [0, 0, 1, 0], [], []>} : vector<1x256xf32>, vector<8x256xf32>, vector<1x8xf32> -> vector<1x8xf32>
    %22 = vector.broadcast %2 : vector<1x1xf32> to vector<1x8xf32>
    %23 = arith.addf %21, %22 : vector<1x8xf32>
    %24 = arith.negf %23 : vector<1x8xf32>
    %25 = math.exp %24 : vector<1x8xf32>
    %cst_15 = arith.constant 1.000000e+00 : f32
    %26 = vector.broadcast %cst_15 : f32 to vector<1x8xf32>
    %27 = arith.addf %26, %25 : vector<1x8xf32>
    %28 = arith.divf %26, %27 : vector<1x8xf32>
    %29 = vector.shape_cast %28 : vector<1x8xf32> to vector<1x1x8xf32>
    %c0_16 = arith.constant 0 : index
    %c0_17 = arith.constant 0 : index
    %c0_18 = arith.constant 0 : index
    %30 = vector.load %arg6[%c0_16, %c0_17, %c0_18] : memref<1x1x8xf32, #tpu.memory_space<vmem>>, vector<1x1x8xf32>
    tpu.vector_store %arg6[%c0_16, %c0_17, %c0_18], %29 {strides = array<i32>} : memref<1x1x8xf32, #tpu.memory_space<vmem>>, vector<1x1x8xf32>,
    return
  }
  func.func @transform_0(%arg0: i32) -> (i32, i32) {
    %c0_i32 = arith.constant 0 : i32
    %c0_i32_0 = arith.constant 0 : i32
    return %arg0, %c0_i32 : i32, i32
  }
  func.func @transform_1(%arg0: i32) -> (i32, i32) {
    %c0_i32 = arith.constant 0 : i32
    %c0_i32_0 = arith.constant 0 : i32
    %c0_i32_1 = arith.constant 0 : i32
    return %c0_i32, %c0_i32_0 : i32, i32
  }
  func.func @transform_2(%arg0: i32) -> (i32, i32) {
    %c0_i32 = arith.constant 0 : i32
    %c0_i32_0 = arith.constant 0 : i32
    %c0_i32_1 = arith.constant 0 : i32
    return %c0_i32, %c0_i32_0 : i32, i32
  }
  func.func @transform_3(%arg0: i32) -> (i32, i32) {
    %c0_i32 = arith.constant 0 : i32
    %c0_i32_0 = arith.constant 0 : i32
    %c0_i32_1 = arith.constant 0 : i32
    return %c0_i32, %c0_i32_0 : i32, i32
  }
  func.func @transform_4(%arg0: i32) -> (i32, i32) {
    %c0_i32 = arith.constant 0 : i32
    %c0_i32_0 = arith.constant 0 : i32
    %c0_i32_1 = arith.constant 0 : i32
    return %c0_i32, %c0_i32_0 : i32, i32
  }
  func.func @transform_5(%arg0: i32) -> (i32, i32, i32) {
    %c0_i32 = arith.constant 0 : i32
    %c0_i32_0 = arith.constant 0 : i32
    %c0_i32_1 = arith.constant 0 : i32
    return %arg0, %c0_i32, %c0_i32_0 : i32, i32, i32
  }
}

</mosaic_0001>

<llo_original>
// kernel: discriminator_forward.1
$region0: #{discriminator_forward.1}
  #allocation0 [shape = 'u32[]', space=smem, size = 0x4, offset = 0x4, fixed_abs, tag = 'smem constant byte address 0x4 - core index']
  #allocation1 [shape = 'u32[144,128]{1,0:T(1,128)}', space=vmem, size = 0x12000, scoped, tag = 'internal scratch']
  %s0 = inlined_call_operand.hbm [shape: f32[8,100], index: 0, kind: input, shape index: {}]
  %s1 = inlined_call_operand.hbm [shape: bf16[100,512], index: 1, kind: input, shape index: {}]
  %s2 = inlined_call_operand.hbm [shape: bf16[512,256], index: 2, kind: input, shape index: {}]
  %s3 = inlined_call_operand.hbm [shape: f32[1,256], index: 3, kind: input, shape index: {}]
  %s4 = inlined_call_operand.vmem [shape: f32[1,769], index: 4, kind: input, shape index: {}]
  %s5 = inlined_call_operand.hbm [shape: f32[1,1,8], index: 5, kind: output, shape index: {}]
  %s6 = sld [smem:[#allocation0]]
  $region46: #{discriminator_forward.1} parent=0
    _
  %s8 = ssub.s32 1, %s6
  %s9 = scalar_select 0, %s8, %s6
  $region1: #{discriminator_forward.1} parent=0
    #allocation2 [shape = 'u8[4096]{0}', space=vmem, size = 0x1000, scoped, tag = 'input window, operand 0, single buffered']
    #allocation3 [shape = 's32[1]{0}', space=sflag, size = 0x4, scoped, tag = 'scoped memory for discriminator_forward.1']
    #allocation4 [shape = 's32[1]{0}', space=sflag, size = 0x4, scoped, tag = 'scoped memory for discriminator_forward.1']
    #allocation5 [shape = 'u8[106496]{0}', space=vmem, size = 0x1a000, scoped, tag = 'input window, operand 1, single buffered']
    #allocation6 [shape = 's32[1]{0}', space=sflag, size = 0x4, scoped, tag = 'scoped memory for discriminator_forward.1']
    #allocation7 [shape = 'u8[262144]{0}', space=vmem, size = 0x40000, scoped, tag = 'input window, operand 2, single buffered']
    #allocation8 [shape = 'u8[1024]{0}', space=vmem, size = 0x400, scoped, tag = 'input window, operand 3, single buffered']
    #allocation9 [shape = 's32[1]{0}', space=sflag, size = 0x4, scoped, tag = 'scoped memory for discriminator_forward.1']
    #allocation10 [shape = 'u8[512]{0}', space=vmem, size = 0x400, scoped, tag = 'output window, operand 0, single buffered']
    %10 = vsyncpa [#allocation3], 0
    %11 = vsyncpa [#allocation6], 0
    %12 = vsyncpa [#allocation9], 0
    %13 = vsyncpa [#allocation4], 0
    // Predicated region
    $region2: #{discriminator_forward.1} parent=1 // pred_check
      _
    $region3: #{discriminator_forward.1} parent=1 // pred_check_branch
      %15 = sbr.rel (0) target = $region5
    $region4: #{discriminator_forward.1} parent=1 // pred_region
      %s17 = ssub.s32 128, 128
      %18 = vsyncadd [#allocation3], %s17
      %s20 = sshll.u32 [#allocation2], 4
      %s21 = int_to_ptr.vmem [resolvable:$true] %s20
      %23 = dma.hbm_to_vmem [thread:$0]  %s0, 128, %s21, [#allocation3]
    $region5: #{discriminator_forward.1} parent=1 // pred_fallthru
      _
    // Predicated region
    $region6: #{discriminator_forward.1} parent=1 // pred_check
      _
    $region7: #{discriminator_forward.1} parent=1 // pred_check_branch
      %25 = sbr.rel (0) target = $region9
    $region8: #{discriminator_forward.1} parent=1 // pred_region
      %s27 = ssub.s32 3328, 3328
      %28 = vsyncadd [#allocation6], %s27
      %s29 = sshll.u32 [#allocation5], 4
      %s30 = int_to_ptr.vmem [resolvable:$true] %s29
      %35 = dma.hbm_to_vmem [thread:$0]  %s1, 3328, %s30, [#allocation6], 256, 256, 16
    $region9: #{discriminator_forward.1} parent=1 // pred_fallthru
      _
    // Predicated region
    $region10: #{discriminator_forward.1} parent=1 // pred_check
      _
    $region11: #{discriminator_forward.1} parent=1 // pred_check_branch
      %37 = sbr.rel (0) target = $region13
    $region12: #{discriminator_forward.1} parent=1 // pred_region
      %s39 = ssub.s32 8192, 8192
      %40 = vsyncadd [#allocation6], %s39
      %s41 = sshll.u32 [#allocation7], 4
      %s42 = int_to_ptr.vmem [resolvable:$true] %s41
      %47 = dma.hbm_to_vmem [thread:$0]  %s2, 8192, %s42, [#allocation6], 128, 128, 8
    $region13: #{discriminator_forward.1} parent=1 // pred_fallthru
      _
    // Predicated region
    $region14: #{discriminator_forward.1} parent=1 // pred_check
      _
    $region15: #{discriminator_forward.1} parent=1 // pred_check_branch
      %49 = sbr.rel (0) target = $region17
    $region16: #{discriminator_forward.1} parent=1 // pred_region
      %s51 = ssub.s32 32, 32
      %52 = vsyncadd [#allocation9], %s51
      %s54 = sshll.u32 [#allocation8], 4
      %s55 = int_to_ptr.vmem [resolvable:$true] %s54
      %57 = dma.hbm_to_vmem [thread:$0]  %s3, 32, %s55, [#allocation9]
    $region17: #{discriminator_forward.1} parent=1 // pred_fallthru
      _
    // Predicated region
    $region18: #{discriminator_forward.1} parent=1 // pred_check
      _
    $region19: #{discriminator_forward.1} parent=1 // pred_check_branch
      %59 = sbr.rel (0) target = $region21
    $region20: #{discriminator_forward.1} parent=1 // pred_region
      _
    $region21: #{discriminator_forward.1} parent=1 // pred_fallthru
      _
    // Predicated region
    $region22: #{discriminator_forward.1} parent=1 // pred_check
      _
    $region23: #{discriminator_forward.1} parent=1 // pred_check_branch
      %61 = sbr.rel (0) target = $region25
    $region24: #{discriminator_forward.1} parent=1 // pred_region
      %62 = dma.done [#allocation3], 128
    $region25: #{discriminator_forward.1} parent=1 // pred_fallthru
      _
    // Predicated region
    $region26: #{discriminator_forward.1} parent=1 // pred_check
      _
    $region27: #{discriminator_forward.1} parent=1 // pred_check_branch
      %64 = sbr.rel (0) target = $region29
    $region28: #{discriminator_forward.1} parent=1 // pred_region
      %65 = dma.done [#allocation6], 3328
    $region29: #{discriminator_forward.1} parent=1 // pred_fallthru
      _
    // Predicated region
    $region30: #{discriminator_forward.1} parent=1 // pred_check
      _
    $region31: #{discriminator_forward.1} parent=1 // pred_check_branch
      %67 = sbr.rel (0) target = $region33
    $region32: #{discriminator_forward.1} parent=1 // pred_region
      %68 = dma.done [#allocation6], 8192
    $region33: #{discriminator_forward.1} parent=1 // pred_fallthru
      _
    // Predicated region
    $region34: #{discriminator_forward.1} parent=1 // pred_check
      _
    $region35: #{discriminator_forward.1} parent=1 // pred_check_branch
      %70 = sbr.rel (0) target = $region37
    $region36: #{discriminator_forward.1} parent=1 // pred_region
      %71 = dma.done [#allocation9], 32
    $region37: #{discriminator_forward.1} parent=1 // pred_fallthru
      _
    %v73 = vld [vmem:[%s4] sm:$0xf]
    %v74 = vld [vmem:[%s4 + $0x4] sm:$0x3]
    %v75 = vld [vmem:[%s4 + $0x6] sm:$0x1]
    %v76 = vld [vmem:[#allocation2] sm:$0xff]
    %v77 = vpack.c.bf16 %v76, %v76
    %v78 = vld [vmem:[#allocation5] sm:$0xff]
    %v79 = vld [vmem:[#allocation5 + $0x8] sm:$0xff]
    %v80 = vld [vmem:[#allocation5 + $0x10] sm:$0xff]
    %v81 = vld [vmem:[#allocation5 + $0x18] sm:$0xff]
    %v82 = vld [vmem:[#allocation5 + $0x20] sm:$0xff]
    %v83 = vld [vmem:[#allocation5 + $0x28] sm:$0xff]
    %v84 = vld [vmem:[#allocation5 + $0x30] sm:$0xff]
    %v85 = vld [vmem:[#allocation5 + $0x38] sm:$0xff]
    %v86 = vld [vmem:[#allocation5 + $0x40] sm:$0xff]
    %v87 = vld [vmem:[#allocation5 + $0x48] sm:$0xff]
    %v88 = vld [vmem:[#allocation5 + $0x50] sm:$0xff]
    %v89 = vld [vmem:[#allocation5 + $0x58] sm:$0xff]
    %v90 = vld [vmem:[#allocation5 + $0x60] sm:$0xff]
    %v91 = vld [vmem:[#allocation5 + $0x68] sm:$0xff]
    %v92 = vld [vmem:[#allocation5 + $0x70] sm:$0xff]
    %v93 = vld [vmem:[#allocation5 + $0x78] sm:$0xff]
    %v94 = vld [vmem:[#allocation5 + $0x80] sm:$0xff]
    %v95 = vld [vmem:[#allocation5 + $0x88] sm:$0xff]
    %v96 = vld [vmem:[#allocation5 + $0x90] sm:$0xff]
    %v97 = vld [vmem:[#allocation5 + $0x98] sm:$0xff]
    %v98 = vld [vmem:[#allocation5 + $0xa0] sm:$0xff]
    %v99 = vld [vmem:[#allocation5 + $0xa8] sm:$0xff]
    %v100 = vld [vmem:[#allocation5 + $0xb0] sm:$0xff]
    %v101 = vld [vmem:[#allocation5 + $0xb8] sm:$0xff]
    %v102 = vld [vmem:[#allocation5 + $0xc0] sm:$0x33]
    %v103 = vld [vmem:[#allocation5 + $0xc8] sm:$0x33]
    %v105 = vlaneseq
    %v106 = vshrl.u32 %v105, 7
    %v107 = vsub.s32 0, %v106
    %v108 = vrot.slane %v73, %v107
    %v109 = vlaneseq
    %v110 = vshrl.u32 %v109, 7
    %v111 = vsub.s32 1, %v110
    %v112 = vrot.slane %v73, %v111
    %v113 = vlaneseq
    %v114 = vshrl.u32 %v113, 7
    %v115 = vsub.s32 2, %v114
    %v116 = vrot.slane %v73, %v115
    %v117 = vlaneseq
    %v118 = vshrl.u32 %v117, 7
    %v119 = vsub.s32 3, %v118
    %v120 = vrot.slane %v73, %v119
    %v151 = vunpack.c.l.b16 %v78
    %v152 = vunpack.c.h.b16 %v78
    %v153 = vunpack.c.l.b16 %v79
    %v154 = vunpack.c.h.b16 %v79
    %v155 = vunpack.c.l.b16 %v80
    %v156 = vunpack.c.h.b16 %v80
    %v157 = vunpack.c.l.b16 %v81
    %v158 = vunpack.c.h.b16 %v81
    %v159 = vunpack.c.l.b16 %v82
    %v160 = vunpack.c.h.b16 %v82
    %v161 = vunpack.c.l.b16 %v83
    %v162 = vunpack.c.h.b16 %v83
    %v163 = vunpack.c.l.b16 %v84
    %v164 = vunpack.c.h.b16 %v84
    %v165 = vunpack.c.l.b16 %v85
    %v166 = vunpack.c.h.b16 %v85
    %v167 = vunpack.c.l.b16 %v86
    %v168 = vunpack.c.h.b16 %v86
    %v169 = vunpack.c.l.b16 %v87
    %v170 = vunpack.c.h.b16 %v87
    %v171 = vunpack.c.l.b16 %v88
    %v172 = vunpack.c.h.b16 %v88
    %v173 = vunpack.c.l.b16 %v89
    %v174 = vunpack.c.h.b16 %v89
    %v175 = vunpack.c.l.b16 %v90
    %v176 = vunpack.c.h.b16 %v90
    %v177 = vunpack.c.l.b16 %v91
    %v178 = vunpack.c.h.b16 %v91
    %v179 = vunpack.c.l.b16 %v92
    %v180 = vunpack.c.h.b16 %v92
    %v181 = vunpack.c.l.b16 %v93
    %v182 = vunpack.c.h.b16 %v93
    %v183 = vunpack.c.l.b16 %v94
    %v184 = vunpack.c.h.b16 %v94
    %v185 = vunpack.c.l.b16 %v95
    %v186 = vunpack.c.h.b16 %v95
    %v187 = vunpack.c.l.b16 %v96
    %v188 = vunpack.c.h.b16 %v96
    %v189 = vunpack.c.l.b16 %v97
    %v190 = vunpack.c.h.b16 %v97
    %v191 = vunpack.c.l.b16 %v98
    %v192 = vunpack.c.h.b16 %v98
    %v193 = vunpack.c.l.b16 %v99
    %v194 = vunpack.c.h.b16 %v99
    %v195 = vunpack.c.l.b16 %v100
    %v196 = vunpack.c.h.b16 %v100
    %v197 = vunpack.c.l.b16 %v101
    %v198 = vunpack.c.h.b16 %v101
    %v199 = vunpack.c.l.b16 %v102
    %v200 = vunpack.c.h.b16 %v102
    %v201 = vunpack.c.l.b16 %v103
    %v202 = vunpack.c.h.b16 %v103
    %v203 = vpack.c.b16 %v155, %v151
    %v204 = vpack.c.b16 %v156, %v152
    %v205 = vpack.c.b16 %v157, %v153
    %v206 = vpack.c.b16 %v158, %v154
    %v207 = vpack.c.b16 %v163, %v159
    %v208 = vpack.c.b16 %v164, %v160
    %v209 = vpack.c.b16 %v165, %v161
    %v210 = vpack.c.b16 %v166, %v162
    %v211 = vpack.c.b16 %v171, %v167
    %v212 = vpack.c.b16 %v172, %v168
    %v213 = vpack.c.b16 %v173, %v169
    %v214 = vpack.c.b16 %v174, %v170
    %v215 = vpack.c.b16 %v179, %v175
    %v216 = vpack.c.b16 %v180, %v176
    %v217 = vpack.c.b16 %v181, %v177
    %v218 = vpack.c.b16 %v182, %v178
    %v219 = vpack.c.b16 %v187, %v183
    %v220 = vpack.c.b16 %v188, %v184
    %v221 = vpack.c.b16 %v189, %v185
    %v222 = vpack.c.b16 %v190, %v186
    %v223 = vpack.c.b16 %v195, %v191
    %v224 = vpack.c.b16 %v196, %v192
    %v225 = vpack.c.b16 %v197, %v193
    %v226 = vpack.c.b16 %v198, %v194
    %v227 = vpack.c.b16 %v199, %v199
    %v228 = vpack.c.b16 %v200, %v200
    %v229 = vpack.c.b16 %v201, %v201
    %v230 = vpack.c.b16 %v202, %v202
    %vm255 = vcmask 818176
    %v257 = vsel %vm255, %v77, 0
    %vm259 = vcmask 1041408
    %v261 = vsel %vm259, %v227, 0
    %v264 = vsel %vm259, %v228, 0
    %v267 = vsel %vm259, %v229, 0
    %v270 = vsel %vm259, %v230, 0
    %272 = vmatprep.subr.bf16.mxu0 0
    %273 = vmatpush1.bf16.msra.mxu0 0
    %274 = vmatprep.subr.bf16.mxu0 %v264
    %275 = vmatpush1.bf16.msra.mxu0 %v261
    %276 = vmatprep.subr.bf16.mxu0 %v224
    %277 = vmatpush1.bf16.msra.mxu0 %v223
    %278 = vmatprep.subr.bf16.mxu0 %v220
    %279 = vmatpush1.bf16.msra.mxu0 %v219
    %280 = vmatprep.subr.bf16.mxu0 %v216
    %281 = vmatpush1.bf16.msra.mxu0 %v215
    %282 = vmatprep.subr.bf16.mxu0 %v212
    %283 = vmatpush1.bf16.msra.mxu0 %v211
    %284 = vmatprep.subr.bf16.mxu0 %v208
    %285 = vmatpush1.bf16.msra.mxu0 %v207
    %286 = vmatprep.subr.bf16.mxu0 %v204
    %287 = vmatpush1.bf16.msra.mxu0 %v203
    %288 = vmatprep.subr.bf16.mxu0 0
    %289 = vmatpush2.bf16.msra.mxu0 0
    %290 = vmatprep.subr.bf16.mxu0 0
    %291 = vmatpush2.bf16.msra.mxu0 0
    %292 = vmatprep.subr.bf16.mxu0 0
    %293 = vmatpush2.bf16.msra.mxu0 0
    %294 = vmatprep.subr.bf16.mxu0 0
    %295 = vmatpush2.bf16.msra.mxu0 0
    %296 = vmatprep.subr.bf16.mxu0 0
    %297 = vmatpush2.bf16.msra.mxu0 0
    %298 = vmatprep.subr.bf16.mxu0 0
    %299 = vmatpush2.bf16.msra.mxu0 0
    %300 = vmatprep.subr.bf16.mxu0 0
    %301 = vmatpush2.bf16.msra.mxu0 0
    %302 = vmatprep.subr.bf16.mxu0 0
    %303 = vmatpush2.bf16.msra.mxu0 0
    %304 = vmatprep.mubr.bf16.mxu0 0
    %305 = vmatmul.mubr.bf16.gmra.mxu0 %v257
    %v306 = vpop.f32.mrf.mxu0
    %v307 = vadd.f32 %v108, %v306
    %v308 = vpop.f32.mrf.mxu0
    %v309 = vadd.f32 %v112, %v308
    %v310 = vpop.f32.mrf.mxu0
    %v311 = vpop.f32.mrf.mxu0
    %312 = vdwg.mxu0
    %313 = vmatprep.subr.bf16.mxu0 0
    %314 = vmatpush1.bf16.msra.mxu0 0
    %315 = vmatprep.subr.bf16.mxu0 %v270
    %316 = vmatpush1.bf16.msra.mxu0 %v267
    %317 = vmatprep.subr.bf16.mxu0 %v226
    %318 = vmatpush1.bf16.msra.mxu0 %v225
    %319 = vmatprep.subr.bf16.mxu0 %v222
    %320 = vmatpush1.bf16.msra.mxu0 %v221
    %321 = vmatprep.subr.bf16.mxu0 %v218
    %322 = vmatpush1.bf16.msra.mxu0 %v217
    %323 = vmatprep.subr.bf16.mxu0 %v214
    %324 = vmatpush1.bf16.msra.mxu0 %v213
    %325 = vmatprep.subr.bf16.mxu0 %v210
    %326 = vmatpush1.bf16.msra.mxu0 %v209
    %327 = vmatprep.subr.bf16.mxu0 %v206
    %328 = vmatpush1.bf16.msra.mxu0 %v205
    %329 = vmatprep.subr.bf16.mxu0 0
    %330 = vmatpush2.bf16.msra.mxu0 0
    %331 = vmatprep.subr.bf16.mxu0 0
    %332 = vmatpush2.bf16.msra.mxu0 0
    %333 = vmatprep.subr.bf16.mxu0 0
    %334 = vmatpush2.bf16.msra.mxu0 0
    %335 = vmatprep.subr.bf16.mxu0 0
    %336 = vmatpush2.bf16.msra.mxu0 0
    %337 = vmatprep.subr.bf16.mxu0 0
    %338 = vmatpush2.bf16.msra.mxu0 0
    %339 = vmatprep.subr.bf16.mxu0 0
    %340 = vmatpush2.bf16.msra.mxu0 0
    %341 = vmatprep.subr.bf16.mxu0 0
    %342 = vmatpush2.bf16.msra.mxu0 0
    %343 = vmatprep.subr.bf16.mxu0 0
    %344 = vmatpush2.bf16.msra.mxu0 0
    %345 = vmatprep.mubr.bf16.mxu0 0
    %346 = vmatmul.mubr.bf16.gmra.mxu0 %v257
    %v347 = vpop.f32.mrf.mxu0
    %v348 = vadd.f32 %v116, %v347
    %v349 = vpop.f32.mrf.mxu0
    %v350 = vadd.f32 %v120, %v349
    %v351 = vpop.f32.mrf.mxu0
    %v352 = vpop.f32.mrf.mxu0
    %353 = vdwg.mxu0
    %v354 = vmul.f32 %v307, 0.2
    %v355 = vmul.f32 %v309, 0.2
    %v356 = vmul.f32 %v348, 0.2
    %v357 = vmul.f32 %v350, 0.2
    %v358 = vmax.f32 %v307, %v354
    %v359 = vmax.f32 %v309, %v355
    %v360 = vmax.f32 %v348, %v356
    %v361 = vmax.f32 %v350, %v357
    %v362 = vpack.c.bf16 %v358, %v358
    %v363 = vpack.c.bf16 %v359, %v359
    %v364 = vpack.c.bf16 %v360, %v360
    %v365 = vpack.c.bf16 %v361, %v361
    %v366 = vld [vmem:[#allocation7] sm:$0xff]
    %v367 = vld [vmem:[#allocation7 + $0x8] sm:$0xff]
    %v368 = vld [vmem:[#allocation7 + $0x10] sm:$0xff]
    %v369 = vld [vmem:[#allocation7 + $0x18] sm:$0xff]
    %v370 = vld [vmem:[#allocation7 + $0x20] sm:$0xff]
    %v371 = vld [vmem:[#allocation7 + $0x28] sm:$0xff]
    %v372 = vld [vmem:[#allocation7 + $0x30] sm:$0xff]
    %v373 = vld [vmem:[#allocation7 + $0x38] sm:$0xff]
    %v374 = vld [vmem:[#allocation7 + $0x40] sm:$0xff]
    %v375 = vld [vmem:[#allocation7 + $0x48] sm:$0xff]
    %v376 = vld [vmem:[#allocation7 + $0x50] sm:$0xff]
    %v377 = vld [vmem:[#allocation7 + $0x58] sm:$0xff]
    %v378 = vld [vmem:[#allocation7 + $0x60] sm:$0xff]
    %v379 = vld [vmem:[#allocation7 + $0x68] sm:$0xff]
    %v380 = vld [vmem:[#allocation7 + $0x70] sm:$0xff]
    %v381 = vld [vmem:[#allocation7 + $0x78] sm:$0xff]
    %v382 = vld [vmem:[#allocation7 + $0x80] sm:$0xff]
    %v383 = vld [vmem:[#allocation7 + $0x88] sm:$0xff]
    %v384 = vld [vmem:[#allocation7 + $0x90] sm:$0xff]
    %v385 = vld [vmem:[#allocation7 + $0x98] sm:$0xff]
    %v386 = vld [vmem:[#allocation7 + $0xa0] sm:$0xff]
    %v387 = vld [vmem:[#allocation7 + $0xa8] sm:$0xff]
    %v388 = vld [vmem:[#allocation7 + $0xb0] sm:$0xff]
    %v389 = vld [vmem:[#allocation7 + $0xb8] sm:$0xff]
    %v390 = vld [vmem:[#allocation7 + $0xc0] sm:$0xff]
    %v391 = vld [vmem:[#allocation7 + $0xc8] sm:$0xff]
    %v392 = vld [vmem:[#allocation7 + $0xd0] sm:$0xff]
    %v393 = vld [vmem:[#allocation7 + $0xd8] sm:$0xff]
    %v394 = vld [vmem:[#allocation7 + $0xe0] sm:$0xff]
    %v395 = vld [vmem:[#allocation7 + $0xe8] sm:$0xff]
    %v396 = vld [vmem:[#allocation7 + $0xf0] sm:$0xff]
    %v397 = vld [vmem:[#allocation7 + $0xf8] sm:$0xff]
    %v398 = vld [vmem:[#allocation7 + $0x100] sm:$0xff]
    %v399 = vld [vmem:[#allocation7 + $0x108] sm:$0xff]
    %v400 = vld [vmem:[#allocation7 + $0x110] sm:$0xff]
    %v401 = vld [vmem:[#allocation7 + $0x118] sm:$0xff]
    %v402 = vld [vmem:[#allocation7 + $0x120] sm:$0xff]
    %v403 = vld [vmem:[#allocation7 + $0x128] sm:$0xff]
    %v404 = vld [vmem:[#allocation7 + $0x130] sm:$0xff]
    %v405 = vld [vmem:[#allocation7 + $0x138] sm:$0xff]
    %v406 = vld [vmem:[#allocation7 + $0x140] sm:$0xff]
    %v407 = vld [vmem:[#allocation7 + $0x148] sm:$0xff]
    %v408 = vld [vmem:[#allocation7 + $0x150] sm:$0xff]
    %v409 = vld [vmem:[#allocation7 + $0x158] sm:$0xff]
    %v410 = vld [vmem:[#allocation7 + $0x160] sm:$0xff]
    %v411 = vld [vmem:[#allocation7 + $0x168] sm:$0xff]
    %v412 = vld [vmem:[#allocation7 + $0x170] sm:$0xff]
    %v413 = vld [vmem:[#allocation7 + $0x178] sm:$0xff]
    %v414 = vld [vmem:[#allocation7 + $0x180] sm:$0xff]
    %v415 = vld [vmem:[#allocation7 + $0x188] sm:$0xff]
    %v416 = vld [vmem:[#allocation7 + $0x190] sm:$0xff]
    %v417 = vld [vmem:[#allocation7 + $0x198] sm:$0xff]
    %v418 = vld [vmem:[#allocation7 + $0x1a0] sm:$0xff]
    %v419 = vld [vmem:[#allocation7 + $0x1a8] sm:$0xff]
    %v420 = vld [vmem:[#allocation7 + $0x1b0] sm:$0xff]
    %v421 = vld [vmem:[#allocation7 + $0x1b8] sm:$0xff]
    %v422 = vld [vmem:[#allocation7 + $0x1c0] sm:$0xff]
    %v423 = vld [vmem:[#allocation7 + $0x1c8] sm:$0xff]
    %v424 = vld [vmem:[#allocation7 + $0x1d0] sm:$0xff]
    %v425 = vld [vmem:[#allocation7 + $0x1d8] sm:$0xff]
    %v426 = vld [vmem:[#allocation7 + $0x1e0] sm:$0xff]
    %v427 = vld [vmem:[#allocation7 + $0x1e8] sm:$0xff]
    %v428 = vld [vmem:[#allocation7 + $0x1f0] sm:$0xff]
    %v429 = vld [vmem:[#allocation7 + $0x1f8] sm:$0xff]
    %v431 = vlaneseq
    %v432 = vshrl.u32 %v431, 7
    %v433 = vsub.s32 0, %v432
    %v434 = vrot.slane %v74, %v433
    %v435 = vlaneseq
    %v436 = vshrl.u32 %v435, 7
    %v437 = vsub.s32 1, %v436
    %v438 = vrot.slane %v74, %v437
    %v505 = vunpack.c.l.b16 %v366
    %v506 = vunpack.c.h.b16 %v366
    %v507 = vunpack.c.l.b16 %v367
    %v508 = vunpack.c.h.b16 %v367
    %v509 = vunpack.c.l.b16 %v368
    %v510 = vunpack.c.h.b16 %v368
    %v511 = vunpack.c.l.b16 %v369
    %v512 = vunpack.c.h.b16 %v369
    %v513 = vunpack.c.l.b16 %v370
    %v514 = vunpack.c.h.b16 %v370
    %v515 = vunpack.c.l.b16 %v371
    %v516 = vunpack.c.h.b16 %v371
    %v517 = vunpack.c.l.b16 %v372
    %v518 = vunpack.c.h.b16 %v372
    %v519 = vunpack.c.l.b16 %v373
    %v520 = vunpack.c.h.b16 %v373
    %v521 = vunpack.c.l.b16 %v374
    %v522 = vunpack.c.h.b16 %v374
    %v523 = vunpack.c.l.b16 %v375
    %v524 = vunpack.c.h.b16 %v375
    %v525 = vunpack.c.l.b16 %v376
    %v526 = vunpack.c.h.b16 %v376
    %v527 = vunpack.c.l.b16 %v377
    %v528 = vunpack.c.h.b16 %v377
    %v529 = vunpack.c.l.b16 %v378
    %v530 = vunpack.c.h.b16 %v378
    %v531 = vunpack.c.l.b16 %v379
    %v532 = vunpack.c.h.b16 %v379
    %v533 = vunpack.c.l.b16 %v380
    %v534 = vunpack.c.h.b16 %v380
    %v535 = vunpack.c.l.b16 %v381
    %v536 = vunpack.c.h.b16 %v381
    %v537 = vunpack.c.l.b16 %v382
    %v538 = vunpack.c.h.b16 %v382
    %v539 = vunpack.c.l.b16 %v383
    %v540 = vunpack.c.h.b16 %v383
    %v541 = vunpack.c.l.b16 %v384
    %v542 = vunpack.c.h.b16 %v384
    %v543 = vunpack.c.l.b16 %v385
    %v544 = vunpack.c.h.b16 %v385
    %v545 = vunpack.c.l.b16 %v386
    %v546 = vunpack.c.h.b16 %v386
    %v547 = vunpack.c.l.b16 %v387
    %v548 = vunpack.c.h.b16 %v387
    %v549 = vunpack.c.l.b16 %v388
    %v550 = vunpack.c.h.b16 %v388
    %v551 = vunpack.c.l.b16 %v389
    %v552 = vunpack.c.h.b16 %v389
    %v553 = vunpack.c.l.b16 %v390
    %v554 = vunpack.c.h.b16 %v390
    %v555 = vunpack.c.l.b16 %v391
    %v556 = vunpack.c.h.b16 %v391
    %v557 = vunpack.c.l.b16 %v392
    %v558 = vunpack.c.h.b16 %v392
    %v559 = vunpack.c.l.b16 %v393
    %v560 = vunpack.c.h.b16 %v393
    %v561 = vunpack.c.l.b16 %v394
    %v562 = vunpack.c.h.b16 %v394
    %v563 = vunpack.c.l.b16 %v395
    %v564 = vunpack.c.h.b16 %v395
    %v565 = vunpack.c.l.b16 %v396
    %v566 = vunpack.c.h.b16 %v396
    %v567 = vunpack.c.l.b16 %v397
    %v568 = vunpack.c.h.b16 %v397
    %v569 = vunpack.c.l.b16 %v398
    %v570 = vunpack.c.h.b16 %v398
    %v571 = vunpack.c.l.b16 %v399
    %v572 = vunpack.c.h.b16 %v399
    %v573 = vunpack.c.l.b16 %v400
    %v574 = vunpack.c.h.b16 %v400
    %v575 = vunpack.c.l.b16 %v401
    %v576 = vunpack.c.h.b16 %v401
    %v577 = vunpack.c.l.b16 %v402
    %v578 = vunpack.c.h.b16 %v402
    %v579 = vunpack.c.l.b16 %v403
    %v580 = vunpack.c.h.b16 %v403
    %v581 = vunpack.c.l.b16 %v404
    %v582 = vunpack.c.h.b16 %v404
    %v583 = vunpack.c.l.b16 %v405
    %v584 = vunpack.c.h.b16 %v405
    %v585 = vunpack.c.l.b16 %v406
    %v586 = vunpack.c.h.b16 %v406
    %v587 = vunpack.c.l.b16 %v407
    %v588 = vunpack.c.h.b16 %v407
    %v589 = vunpack.c.l.b16 %v408
    %v590 = vunpack.c.h.b16 %v408
    %v591 = vunpack.c.l.b16 %v409
    %v592 = vunpack.c.h.b16 %v409
    %v593 = vunpack.c.l.b16 %v410
    %v594 = vunpack.c.h.b16 %v410
    %v595 = vunpack.c.l.b16 %v411
    %v596 = vunpack.c.h.b16 %v411
    %v597 = vunpack.c.l.b16 %v412
    %v598 = vunpack.c.h.b16 %v412
    %v599 = vunpack.c.l.b16 %v413
    %v600 = vunpack.c.h.b16 %v413
    %v601 = vunpack.c.l.b16 %v414
    %v602 = vunpack.c.h.b16 %v414
    %v603 = vunpack.c.l.b16 %v415
    %v604 = vunpack.c.h.b16 %v415
    %v605 = vunpack.c.l.b16 %v416
    %v606 = vunpack.c.h.b16 %v416
    %v607 = vunpack.c.l.b16 %v417
    %v608 = vunpack.c.h.b16 %v417
    %v609 = vunpack.c.l.b16 %v418
    %v610 = vunpack.c.h.b16 %v418
    %v611 = vunpack.c.l.b16 %v419
    %v612 = vunpack.c.h.b16 %v419
    %v613 = vunpack.c.l.b16 %v420
    %v614 = vunpack.c.h.b16 %v420
    %v615 = vunpack.c.l.b16 %v421
    %v616 = vunpack.c.h.b16 %v421
    %v617 = vunpack.c.l.b16 %v422
    %v618 = vunpack.c.h.b16 %v422
    %v619 = vunpack.c.l.b16 %v423
    %v620 = vunpack.c.h.b16 %v423
    %v621 = vunpack.c.l.b16 %v424
    %v622 = vunpack.c.h.b16 %v424
    %v623 = vunpack.c.l.b16 %v425
    %v624 = vunpack.c.h.b16 %v425
    %v625 = vunpack.c.l.b16 %v426
    %v626 = vunpack.c.h.b16 %v426
    %v627 = vunpack.c.l.b16 %v427
    %v628 = vunpack.c.h.b16 %v427
    %v629 = vunpack.c.l.b16 %v428
    %v630 = vunpack.c.h.b16 %v428
    %v631 = vunpack.c.l.b16 %v429
    %v632 = vunpack.c.h.b16 %v429
    %v633 = vpack.c.b16 %v507, %v505
    %v634 = vpack.c.b16 %v508, %v506
    %v635 = vpack.c.b16 %v511, %v509
    %v636 = vpack.c.b16 %v512, %v510
    %v637 = vpack.c.b16 %v515, %v513
    %v638 = vpack.c.b16 %v516, %v514
    %v639 = vpack.c.b16 %v519, %v517
    %v640 = vpack.c.b16 %v520, %v518
    %v641 = vpack.c.b16 %v523, %v521
    %v642 = vpack.c.b16 %v524, %v522
    %v643 = vpack.c.b16 %v527, %v525
    %v644 = vpack.c.b16 %v528, %v526
    %v645 = vpack.c.b16 %v531, %v529
    %v646 = vpack.c.b16 %v532, %v530
    %v647 = vpack.c.b16 %v535, %v533
    %v648 = vpack.c.b16 %v536, %v534
    %v649 = vpack.c.b16 %v539, %v537
    %v650 = vpack.c.b16 %v540, %v538
    %v651 = vpack.c.b16 %v543, %v541
    %v652 = vpack.c.b16 %v544, %v542
    %v653 = vpack.c.b16 %v547, %v545
    %v654 = vpack.c.b16 %v548, %v546
    %v655 = vpack.c.b16 %v551, %v549
    %v656 = vpack.c.b16 %v552, %v550
    %v657 = vpack.c.b16 %v555, %v553
    %v658 = vpack.c.b16 %v556, %v554
    %v659 = vpack.c.b16 %v559, %v557
    %v660 = vpack.c.b16 %v560, %v558
    %v661 = vpack.c.b16 %v563, %v561
    %v662 = vpack.c.b16 %v564, %v562
    %v663 = vpack.c.b16 %v567, %v565
    %v664 = vpack.c.b16 %v568, %v566
    %v665 = vpack.c.b16 %v571, %v569
    %v666 = vpack.c.b16 %v572, %v570
    %v667 = vpack.c.b16 %v575, %v573
    %v668 = vpack.c.b16 %v576, %v574
    %v669 = vpack.c.b16 %v579, %v577
    %v670 = vpack.c.b16 %v580, %v578
    %v671 = vpack.c.b16 %v583, %v581
    %v672 = vpack.c.b16 %v584, %v582
    %v673 = vpack.c.b16 %v587, %v585
    %v674 = vpack.c.b16 %v588, %v586
    %v675 = vpack.c.b16 %v591, %v589
    %v676 = vpack.c.b16 %v592, %v590
    %v677 = vpack.c.b16 %v595, %v593
    %v678 = vpack.c.b16 %v596, %v594
    %v679 = vpack.c.b16 %v599, %v597
    %v680 = vpack.c.b16 %v600, %v598
    %v681 = vpack.c.b16 %v603, %v601
    %v682 = vpack.c.b16 %v604, %v602
    %v683 = vpack.c.b16 %v607, %v605
    %v684 = vpack.c.b16 %v608, %v606
    %v685 = vpack.c.b16 %v611, %v609
    %v686 = vpack.c.b16 %v612, %v610
    %v687 = vpack.c.b16 %v615, %v613
    %v688 = vpack.c.b16 %v616, %v614
    %v689 = vpack.c.b16 %v619, %v617
    %v690 = vpack.c.b16 %v620, %v618
    %v691 = vpack.c.b16 %v623, %v621
    %v692 = vpack.c.b16 %v624, %v622
    %v693 = vpack.c.b16 %v627, %v625
    %v694 = vpack.c.b16 %v628, %v626
    %v695 = vpack.c.b16 %v631, %v629
    %v696 = vpack.c.b16 %v632, %v630
    %761 = vmatprep.subr.bf16.mxu0 %v648
    %762 = vmatpush1.bf16.msra.mxu0 %v647
    %763 = vmatprep.subr.bf16.mxu0 %v646
    %764 = vmatpush1.bf16.msra.mxu0 %v645
    %765 = vmatprep.subr.bf16.mxu0 %v644
    %766 = vmatpush1.bf16.msra.mxu0 %v643
    %767 = vmatprep.subr.bf16.mxu0 %v642
    %768 = vmatpush1.bf16.msra.mxu0 %v641
    %769 = vmatprep.subr.bf16.mxu0 %v640
    %770 = vmatpush1.bf16.msra.mxu0 %v639
    %771 = vmatprep.subr.bf16.mxu0 %v638
    %772 = vmatpush1.bf16.msra.mxu0 %v637
    %773 = vmatprep.subr.bf16.mxu0 %v636
    %774 = vmatpush1.bf16.msra.mxu0 %v635
    %775 = vmatprep.subr.bf16.mxu0 %v634
    %776 = vmatpush1.bf16.msra.mxu0 %v633
    %777 = vmatprep.subr.bf16.mxu0 %v664
    %778 = vmatpush2.bf16.msra.mxu0 %v663
    %779 = vmatprep.subr.bf16.mxu0 %v662
    %780 = vmatpush2.bf16.msra.mxu0 %v661
    %781 = vmatprep.subr.bf16.mxu0 %v660
    %782 = vmatpush2.bf16.msra.mxu0 %v659
    %783 = vmatprep.subr.bf16.mxu0 %v658
    %784 = vmatpush2.bf16.msra.mxu0 %v657
    %785 = vmatprep.subr.bf16.mxu0 %v656
    %786 = vmatpush2.bf16.msra.mxu0 %v655
    %787 = vmatprep.subr.bf16.mxu0 %v654
    %788 = vmatpush2.bf16.msra.mxu0 %v653
    %789 = vmatprep.subr.bf16.mxu0 %v652
    %790 = vmatpush2.bf16.msra.mxu0 %v651
    %791 = vmatprep.subr.bf16.mxu0 %v650
    %792 = vmatpush2.bf16.msra.mxu0 %v649
    %793 = vmatprep.mubr.bf16.mxu0 %v363
    %794 = vmatmul.mubr.bf16.gmra.mxu0 %v362
    %v795 = vpop.f32.mrf.mxu0
    %v796 = vadd.f32 %v434, %v795
    %v797 = vpop.f32.mrf.mxu0
    %v798 = vadd.f32 %v438, %v797
    %v799 = vpop.f32.mrf.mxu0
    %v800 = vpop.f32.mrf.mxu0
    %801 = vdwg.mxu0
    %802 = vmatprep.subr.bf16.mxu0 %v680
    %803 = vmatpush1.bf16.msra.mxu0 %v679
    %804 = vmatprep.subr.bf16.mxu0 %v678
    %805 = vmatpush1.bf16.msra.mxu0 %v677
    %806 = vmatprep.subr.bf16.mxu0 %v676
    %807 = vmatpush1.bf16.msra.mxu0 %v675
    %808 = vmatprep.subr.bf16.mxu0 %v674
    %809 = vmatpush1.bf16.msra.mxu0 %v673
    %810 = vmatprep.subr.bf16.mxu0 %v672
    %811 = vmatpush1.bf16.msra.mxu0 %v671
    %812 = vmatprep.subr.bf16.mxu0 %v670
    %813 = vmatpush1.bf16.msra.mxu0 %v669
    %814 = vmatprep.subr.bf16.mxu0 %v668
    %815 = vmatpush1.bf16.msra.mxu0 %v667
    %816 = vmatprep.subr.bf16.mxu0 %v666
    %817 = vmatpush1.bf16.msra.mxu0 %v665
    %818 = vmatprep.subr.bf16.mxu0 %v696
    %819 = vmatpush2.bf16.msra.mxu0 %v695
    %820 = vmatprep.subr.bf16.mxu0 %v694
    %821 = vmatpush2.bf16.msra.mxu0 %v693
    %822 = vmatprep.subr.bf16.mxu0 %v692
    %823 = vmatpush2.bf16.msra.mxu0 %v691
    %824 = vmatprep.subr.bf16.mxu0 %v690
    %825 = vmatpush2.bf16.msra.mxu0 %v689
    %826 = vmatprep.subr.bf16.mxu0 %v688
    %827 = vmatpush2.bf16.msra.mxu0 %v687
    %828 = vmatprep.subr.bf16.mxu0 %v686
    %829 = vmatpush2.bf16.msra.mxu0 %v685
    %830 = vmatprep.subr.bf16.mxu0 %v684
    %831 = vmatpush2.bf16.msra.mxu0 %v683
    %832 = vmatprep.subr.bf16.mxu0 %v682
    %833 = vmatpush2.bf16.msra.mxu0 %v681
    %834 = vmatprep.mubr.bf16.mxu0 %v365
    %835 = vmatmul.mubr.bf16.gmra.mxu0 %v364
    %v836 = vpop.f32.mrf.mxu0
    %v837 = vadd.f32 %v796, %v836
    %v838 = vpop.f32.mrf.mxu0
    %v839 = vadd.f32 %v798, %v838
    %v840 = vpop.f32.mrf.mxu0
    %v841 = vpop.f32.mrf.mxu0
    %842 = vdwg.mxu0
    %v843 = vmul.f32 %v837, 0.2
    %v844 = vmul.f32 %v839, 0.2
    %v845 = vmax.f32 %v837, %v843
    %v846 = vmax.f32 %v839, %v844
    %v847 = vld [vmem:[#allocation8] sm:$0x3]
    %849 = vset.pattern.permute.xlu0 0
    %850 = vperm.xlu0 %849, %v75
    %v851 = vpop.permute.xlu0 %850
    %v853 = vlaneseq
    %v854 = vshrl.u32 %v853, 7
    %v855 = vsub.s32 0, %v854
    %v856 = vrot.slane %v851, %v855
    %v858 = vlaneseq
    %v859 = vshrl.u32 %v858, 7
    %v860 = vsub.s32 0, %v859
    %v861 = vrot.slane %v847, %v860
    %v862 = vlaneseq
    %v863 = vshrl.u32 %v862, 7
    %v864 = vsub.s32 1, %v863
    %v865 = vrot.slane %v847, %v864
    %868 = vmatprep.subr.mxu0 0.0
    %869 = vmatpush1.xpose.msra.mxu0 0.0
    %870 = vmatprep.subr.mxu0 0.0
    %871 = vmatpush1.xpose.msra.mxu0 0.0
    %872 = vmatprep.subr.mxu0 0.0
    %873 = vmatpush1.xpose.msra.mxu0 0.0
    %874 = vmatprep.subr.mxu0 0.0
    %875 = vmatpush1.xpose.msra.mxu0 0.0
    %876 = vmatprep.subr.mxu0 0.0
    %877 = vmatpush1.xpose.msra.mxu0 0.0
    %878 = vmatprep.subr.mxu0 0.0
    %879 = vmatpush1.xpose.msra.mxu0 0.0
    %880 = vmatprep.subr.mxu0 0.0
    %881 = vmatpush1.xpose.msra.mxu0 0.0
    %882 = vmatprep.subr.mxu0 0.0
    %883 = vmatpush1.xpose.msra.mxu0 0.0
    %884 = vmatprep.subr.mxu0 0.0
    %885 = vmatpush1.xpose.msra.mxu0 0.0
    %886 = vmatprep.subr.mxu0 0.0
    %887 = vmatpush1.xpose.msra.mxu0 0.0
    %888 = vmatprep.subr.mxu0 0.0
    %889 = vmatpush1.xpose.msra.mxu0 0.0
    %890 = vmatprep.subr.mxu0 0.0
    %891 = vmatpush1.xpose.msra.mxu0 0.0
    %892 = vmatprep.subr.mxu0 0.0
    %893 = vmatpush1.xpose.msra.mxu0 0.0
    %894 = vmatprep.subr.mxu0 0.0
    %895 = vmatpush1.xpose.msra.mxu0 0.0
    %896 = vmatprep.subr.mxu0 0.0
    %897 = vmatpush1.xpose.msra.mxu0 0.0
    %898 = vmatprep.subr.mxu0 %v846
    %899 = vmatpush1.xpose.msra.mxu0 %v845
    %900 = vmatprep.subr.mxu0 0.0
    %901 = vmatpush2.xpose.msra.mxu0 0.0
    %902 = vmatprep.subr.mxu0 0.0
    %903 = vmatpush2.xpose.msra.mxu0 0.0
    %904 = vmatprep.subr.mxu0 0.0
    %905 = vmatpush2.xpose.msra.mxu0 0.0
    %906 = vmatprep.subr.mxu0 0.0
    %907 = vmatpush2.xpose.msra.mxu0 0.0
    %908 = vmatprep.subr.mxu0 0.0
    %909 = vmatpush2.xpose.msra.mxu0 0.0
    %910 = vmatprep.subr.mxu0 0.0
    %911 = vmatpush2.xpose.msra.mxu0 0.0
    %912 = vmatprep.subr.mxu0 0.0
    %913 = vmatpush2.xpose.msra.mxu0 0.0
    %914 = vmatprep.subr.mxu0 0.0
    %915 = vmatpush2.xpose.msra.mxu0 0.0
    %916 = vmatprep.subr.mxu0 0.0
    %917 = vmatpush2.xpose.msra.mxu0 0.0
    %918 = vmatprep.subr.mxu0 0.0
    %919 = vmatpush2.xpose.msra.mxu0 0.0
    %920 = vmatprep.subr.mxu0 0.0
    %921 = vmatpush2.xpose.msra.mxu0 0.0
    %922 = vmatprep.subr.mxu0 0.0
    %923 = vmatpush2.xpose.msra.mxu0 0.0
    %924 = vmatprep.subr.mxu0 0.0
    %925 = vmatpush2.xpose.msra.mxu0 0.0
    %926 = vmatprep.subr.mxu0 0.0
    %927 = vmatpush2.xpose.msra.mxu0 0.0
    %928 = vmatprep.subr.mxu0 0.0
    %929 = vmatpush2.xpose.msra.mxu0 0.0
    %930 = vmatprep.subr.mxu0 0.0
    %931 = vmatpush2.xpose.msra.mxu0 0.0
    %932 = vmatprep.mubr.f32.mxu0 %v865
    %933 = vmatmul.mubr.f32.gmra.mxu0 %v861
    %v934 = vpop.f32.mrf.mxu0
    %v935 = vadd.f32 %v856, %v934
    %v936 = vpop.f32.mrf.mxu0
    %937 = vdwg.mxu0
    %v938 = vxor.u32 %v935, 2147483648
    %v939 = vmul.f32 %v938, 1.442695
    %v940 = vpow.pop %v939
    %v941 = vadd.f32 %v940, 1.0
    %v942 = vrcp.pop %v941
    %v943 = vmul.f32 1.0, %v942
    %vm944 = vcmask 57344
    %945 = vst.msk [vmem:[#allocation10] sm:$0x1] %vm944, %v943
    // Predicated region
    $region38: #{discriminator_forward.1} parent=1 // pred_check
      _
    $region39: #{discriminator_forward.1} parent=1 // pred_check_branch
      %947 = sbr.rel (0) target = $region41
    $region40: #{discriminator_forward.1} parent=1 // pred_region
      %s949 = ssub.s32 16, 16
      %950 = vsyncadd [#allocation4], %s949
      %s952 = sshll.u32 [#allocation10], 4
      %s953 = int_to_ptr.vmem [resolvable:$true] %s952
      %955 = dma.vmem_to_hbm [thread:$0]  %s953, 16, %s5, [#allocation4]
    $region41: #{discriminator_forward.1} parent=1 // pred_fallthru
      _
    // Predicated region
    $region42: #{discriminator_forward.1} parent=1 // pred_check
      _
    $region43: #{discriminator_forward.1} parent=1 // pred_check_branch
      %957 = sbr.rel (0) target = $region45
    $region44: #{discriminator_forward.1} parent=1 // pred_region
      %958 = dma.done [#allocation4], 16
    $region45: #{discriminator_forward.1} parent=1 // pred_fallthru
      _
    %959 = vsyncpa [#allocation3], 1
    %960 = vsyncpa [#allocation6], 1
    %961 = vsyncpa [#allocation9], 1
    %962 = vsyncpa [#allocation4], 1

</llo_original>
